<compile_context>
chip_gen: v6e
topology: v6e:2x2x1
jax: 0.10.0
libtpu: 0.0.40
codegen_flags: <defaults>
</compile_context>

<pallas_src>
import functools

import jax
import jax.numpy as jnp
from jax.experimental import pallas as pl
from jax.experimental.pallas import tpu as pltpu


def _pos_encoding_kernel(table_ref, out_ref, *, w, block_h, grid_steps):
    # table_ref: (live, num_feats) VMEM, live = w + h - 1 (only rows actually indexed)
    # out_ref:   (block_h * w, num_feats) VMEM -> rows for i in [g*block_h, (g+1)*block_h)
    #
    # idx[s] = s // w + s % w  ==>  out rows [i*w, (i+1)*w) == table[i : i+w, :]
    # i.e. a sliding window over the table: pure load/store copies, no one-hot, no MXU.
    if grid_steps == 1:
        g = 0  # single-step path: every slice below is fully static
    else:
        g = pl.program_id(0)

    # block_h is a small compile-time constant -> unrolled copies.
    for li in range(block_h):
        src_start = g * block_h + li
        out_ref[li * w:(li + 1) * w, :] = table_ref[pl.ds(src_start, w), :]


def strengthen_spatial_pos_encoding(weight, batch, w, h, *, block_h=None):
    """weight: (embed_dim, num_feats) embedding table. Returns (batch, h*w, num_feats)."""
    embed_dim, num_feats = weight.shape
    seq = h * w
    live = w + h - 1  # rows actually referenced: max index is w + h - 2
    assert live <= embed_dim, "embed_dim too small for max index w+h-2"

    # Only the live window of the embedding table is ever brought into VMEM.
    table = weight[:live]

    if block_h is None:
        block_h = h  # demo-size: one grid step produces the whole (seq, num_feats) slab
    assert h % block_h == 0, "block_h must divide h"
    grid_steps = h // block_h
    block_rows = block_h * w
    # (8, 128) rule: block's second-to-last dim must be a multiple of 8 unless the block
    # spans the full array (grid_steps == 1 covers that case).
    assert grid_steps == 1 or block_rows % 8 == 0, "block_h * w must be a multiple of 8"

    kernel = functools.partial(
        _pos_encoding_kernel, w=w, block_h=block_h, grid_steps=grid_steps
    )
    pos = pl.pallas_call(
        kernel,
        out_shape=jax.ShapeDtypeStruct((seq, num_feats), weight.dtype),
        grid_spec=pltpu.PrefetchScalarGridSpec(
            num_scalar_prefetch=0,
            grid=(grid_steps,),
            in_specs=[
                # Whole (live, num_feats) window resident; constant block index so the
                # table DMA is not repeated per grid step.
                pl.BlockSpec((live, num_feats), lambda g: (0, 0)),
            ],
            out_specs=pl.BlockSpec((block_rows, num_feats), lambda g: (g, 0)),
        ),
        compiler_params=pltpu.CompilerParams(
            # Row-blocks are independent -> shard across TensorCores when tiled (v7x).
            dimension_semantics=("parallel",),
            # No vmem_limit_bytes override: per-generation scoped defaults are ample for
            # the (w+h-1, num_feats) table + (block_rows, num_feats) output and avoid
            # capping tile sizes on v5e/v6e's 128 MiB VMEM.
        ),
    )(table)

    # Batch "repeat" outside the kernel. If the consumer materializes it, this still
    # writes batch*seq*num_feats bytes in XLA; prefer consuming `pos` directly so the
    # broadcast fuses into the consumer.
    return jnp.broadcast_to(pos[None], (batch, seq, num_feats))


if __name__ == "__main__":
    # Small shapes consistent with the module: square spatial 8x8 ->
    # max gather index = w + h - 2 = 14, so embed_dim = 16 rows is enough.
    batch, w, h = 2, 8, 8
    embed_dim, num_feats = 16, 32

    key = jax.random.PRNGKey(0)
    # nn.init.uniform_ default: U[0, 1)
    weight = jax.random.uniform(key, (embed_dim, num_feats), dtype=jnp.float32)

    out = strengthen_spatial_pos_encoding(weight, batch, w, h)
    out = jax.block_until_ready(out)

    # Pure-JAX reference for correctness.
    idx = jnp.array([i + j for i in range(h) for j in range(w)], dtype=jnp.int32)
    ref = jnp.broadcast_to(weight[idx], (batch, h * w, num_feats))
    assert out.shape == (batch, h * w, num_feats)
    assert jnp.array_equal(out, ref), "mismatch vs reference"

    print("KERNEL_OK")
</pallas_src>

<mosaic_0001>
module attributes {stable_mosaic.version = 11 : i64} {
  func.func @_pos_encoding_kernel(%arg0: i32, %arg1: memref<15x32xf32, #tpu.memory_space<vmem>>, %arg2: memref<64x32xf32, #tpu.memory_space<vmem>>) attributes {dimension_semantics = [#tpu.dimension_semantics<parallel>], iteration_bounds = array<i64: 1>, scalar_prefetch = 0 : i64, scratch_operands = 0 : i64, tpu.core_type = #tpu.core_type<tc>, window_params = [{pipeline_mode = #tpu.pipeline_mode<synchronous>, transform_indices = @transform_0, window_bounds = array<i64: 15, 32>}, {transform_indices = @transform_1, window_bounds = array<i64: 64, 32>}]} {
    %c0 = arith.constant 0 : index
    %c0_0 = arith.constant 0 : index
    %0 = vector.load %arg1[%c0, %c0_0] : memref<15x32xf32, #tpu.memory_space<vmem>>, vector<8x32xf32>
    %c0_1 = arith.constant 0 : index
    %c0_2 = arith.constant 0 : index
    %1 = vector.load %arg2[%c0_1, %c0_2] : memref<64x32xf32, #tpu.memory_space<vmem>>, vector<8x32xf32>
    tpu.vector_store %arg2[%c0_1, %c0_2], %0 {strides = array<i32>} : memref<64x32xf32, #tpu.memory_space<vmem>>, vector<8x32xf32>,
    %c1 = arith.constant 1 : index
    %c0_3 = arith.constant 0 : index
    %2 = vector.load %arg1[%c1, %c0_3] : memref<15x32xf32, #tpu.memory_space<vmem>>, vector<8x32xf32>
    %c8 = arith.constant 8 : index
    %c0_4 = arith.constant 0 : index
    %3 = vector.load %arg2[%c8, %c0_4] : memref<64x32xf32, #tpu.memory_space<vmem>>, vector<8x32xf32>
    tpu.vector_store %arg2[%c8, %c0_4], %2 {strides = array<i32>} : memref<64x32xf32, #tpu.memory_space<vmem>>, vector<8x32xf32>,
    %c2 = arith.constant 2 : index
    %c0_5 = arith.constant 0 : index
    %4 = vector.load %arg1[%c2, %c0_5] : memref<15x32xf32, #tpu.memory_space<vmem>>, vector<8x32xf32>
    %c16 = arith.constant 16 : index
    %c0_6 = arith.constant 0 : index
    %5 = vector.load %arg2[%c16, %c0_6] : memref<64x32xf32, #tpu.memory_space<vmem>>, vector<8x32xf32>
    tpu.vector_store %arg2[%c16, %c0_6], %4 {strides = array<i32>} : memref<64x32xf32, #tpu.memory_space<vmem>>, vector<8x32xf32>,
    %c3 = arith.constant 3 : index
    %c0_7 = arith.constant 0 : index
    %6 = vector.load %arg1[%c3, %c0_7] : memref<15x32xf32, #tpu.memory_space<vmem>>, vector<8x32xf32>
    %c24 = arith.constant 24 : index
    %c0_8 = arith.constant 0 : index
    %7 = vector.load %arg2[%c24, %c0_8] : memref<64x32xf32, #tpu.memory_space<vmem>>, vector<8x32xf32>
    tpu.vector_store %arg2[%c24, %c0_8], %6 {strides = array<i32>} : memref<64x32xf32, #tpu.memory_space<vmem>>, vector<8x32xf32>,
    %c4 = arith.constant 4 : index
    %c0_9 = arith.constant 0 : index
    %8 = vector.load %arg1[%c4, %c0_9] : memref<15x32xf32, #tpu.memory_space<vmem>>, vector<8x32xf32>
    %c32 = arith.constant 32 : index
    %c0_10 = arith.constant 0 : index
    %9 = vector.load %arg2[%c32, %c0_10] : memref<64x32xf32, #tpu.memory_space<vmem>>, vector<8x32xf32>
    tpu.vector_store %arg2[%c32, %c0_10], %8 {strides = array<i32>} : memref<64x32xf32, #tpu.memory_space<vmem>>, vector<8x32xf32>,
    %c5 = arith.constant 5 : index
    %c0_11 = arith.constant 0 : index
    %10 = vector.load %arg1[%c5, %c0_11] : memref<15x32xf32, #tpu.memory_space<vmem>>, vector<8x32xf32>
    %c40 = arith.constant 40 : index
    %c0_12 = arith.constant 0 : index
    %11 = vector.load %arg2[%c40, %c0_12] : memref<64x32xf32, #tpu.memory_space<vmem>>, vector<8x32xf32>
    tpu.vector_store %arg2[%c40, %c0_12], %10 {strides = array<i32>} : memref<64x32xf32, #tpu.memory_space<vmem>>, vector<8x32xf32>,
    %c6 = arith.constant 6 : index
    %c0_13 = arith.constant 0 : index
    %12 = vector.load %arg1[%c6, %c0_13] : memref<15x32xf32, #tpu.memory_space<vmem>>, vector<8x32xf32>
    %c48 = arith.constant 48 : index
    %c0_14 = arith.constant 0 : index
    %13 = vector.load %arg2[%c48, %c0_14] : memref<64x32xf32, #tpu.memory_space<vmem>>, vector<8x32xf32>
    tpu.vector_store %arg2[%c48, %c0_14], %12 {strides = array<i32>} : memref<64x32xf32, #tpu.memory_space<vmem>>, vector<8x32xf32>,
    %c7 = arith.constant 7 : index
    %c0_15 = arith.constant 0 : index
    %14 = vector.load %arg1[%c7, %c0_15] : memref<15x32xf32, #tpu.memory_space<vmem>>, vector<8x32xf32>
    %c56 = arith.constant 56 : index
    %c0_16 = arith.constant 0 : index
    %15 = vector.load %arg2[%c56, %c0_16] : memref<64x32xf32, #tpu.memory_space<vmem>>, vector<8x32xf32>
    tpu.vector_store %arg2[%c56, %c0_16], %14 {strides = array<i32>} : memref<64x32xf32, #tpu.memory_space<vmem>>, vector<8x32xf32>,
    return
  }
  func.func @transform_0(%arg0: i32) -> (i32, i32) {
    %c0_i32 = arith.constant 0 : i32
    %c0_i32_0 = arith.constant 0 : i32
    %c0_i32_1 = arith.constant 0 : i32
    return %c0_i32, %c0_i32_0 : i32, i32
  }
  func.func @transform_1(%arg0: i32) -> (i32, i32) {
    %c0_i32 = arith.constant 0 : i32
    %c0_i32_0 = arith.constant 0 : i32
    return %arg0, %c0_i32 : i32, i32
  }
}

</mosaic_0001>

<llo_original>
// kernel: tpu_custom_call.1
$region0: #{tpu_custom_call.1}
  #allocation0 [shape = 'u32[]', space=smem, size = 0x4, offset = 0x4, fixed_abs, tag = 'smem constant byte address 0x4 - core index']
  #allocation1 [shape = 'u32[144,128]{1,0:T(1,128)}', space=vmem, size = 0x12000, scoped, tag = 'internal scratch']
  %s0 = inlined_call_operand.hbm [shape: f32[15,32], index: 0, kind: input, shape index: {}]
  %s1 = inlined_call_operand.vmem [shape: f32[64,32], index: 1, kind: output, shape index: {}]
  %s2 = sld [smem:[#allocation0]]
  $region18: #{tpu_custom_call.1} parent=0
    _
  %s4 = ssub.s32 1, %s2
  %s5 = scalar_select 0, %s4, %s2
  $region1: #{tpu_custom_call.1} parent=0
    #allocation2 [shape = 'u8[8192]{0}', space=vmem, size = 0x2000, scoped, tag = 'input window, operand 0, single buffered']
    #allocation3 [shape = 's32[1]{0}', space=sflag, size = 0x4, scoped, tag = 'scoped memory for tpu_custom_call.1']
    %6 = vsyncpa [#allocation3], 0
    // Predicated region
    $region2: #{tpu_custom_call.1} parent=1 // pred_check
      _
    $region3: #{tpu_custom_call.1} parent=1 // pred_check_branch
      %8 = sbr.rel (0) target = $region5
    $region4: #{tpu_custom_call.1} parent=1 // pred_region
      %s10 = ssub.s32 256, 256
      %11 = vsyncadd [#allocation3], %s10
      %s12 = sshll.u32 [#allocation2], 4
      %s13 = int_to_ptr.vmem [resolvable:$true] %s12
      %18 = dma.hbm_to_vmem [thread:$0]  %s0, 256, %s13, [#allocation3], 128, 128, 8
    $region5: #{tpu_custom_call.1} parent=1 // pred_fallthru
      _
    // Predicated region
    $region6: #{tpu_custom_call.1} parent=1 // pred_check
      _
    $region7: #{tpu_custom_call.1} parent=1 // pred_check_branch
      %20 = sbr.rel (0) target = $region9
    $region8: #{tpu_custom_call.1} parent=1 // pred_region
      %21 = dma.done [#allocation3], 256
    $region9: #{tpu_custom_call.1} parent=1 // pred_fallthru
      _
    %v22 = vld [vmem:[#allocation2] sm:$0xff]
    %vm23 = vcmask 261120
    %24 = vst.msk [vmem:[%s1] sm:$0xff] %vm23, %v22
    %v25 = vld [vmem:[#allocation2 + $0x1] sm:$0xff]
    %26 = vst.msk [vmem:[%s1 + $0x8] sm:$0xff] %vm23, %v25
    %v27 = vld [vmem:[#allocation2 + $0x2] sm:$0xff]
    %28 = vst.msk [vmem:[%s1 + $0x10] sm:$0xff] %vm23, %v27
    %v29 = vld [vmem:[#allocation2 + $0x3] sm:$0xff]
    %30 = vst.msk [vmem:[%s1 + $0x18] sm:$0xff] %vm23, %v29
    %v31 = vld [vmem:[#allocation2 + $0x4] sm:$0xff]
    %32 = vst.msk [vmem:[%s1 + $0x20] sm:$0xff] %vm23, %v31
    %v33 = vld [vmem:[#allocation2 + $0x5] sm:$0xff]
    %34 = vst.msk [vmem:[%s1 + $0x28] sm:$0xff] %vm23, %v33
    %v35 = vld [vmem:[#allocation2 + $0x6] sm:$0xff]
    %36 = vst.msk [vmem:[%s1 + $0x30] sm:$0xff] %vm23, %v35
    %v37 = vld [vmem:[#allocation2 + $0x7] sm:$0xff]
    %38 = vst.msk [vmem:[%s1 + $0x38] sm:$0xff] %vm23, %v37
    // Predicated region
    $region10: #{tpu_custom_call.1} parent=1 // pred_check
      _
    $region11: #{tpu_custom_call.1} parent=1 // pred_check_branch
      %40 = sbr.rel (0) target = $region13
    $region12: #{tpu_custom_call.1} parent=1 // pred_region
      _
    $region13: #{tpu_custom_call.1} parent=1 // pred_fallthru
      _
    // Predicated region
    $region14: #{tpu_custom_call.1} parent=1 // pred_check
      _
    $region15: #{tpu_custom_call.1} parent=1 // pred_check_branch
      %42 = sbr.rel (0) target = $region17
    $region16: #{tpu_custom_call.1} parent=1 // pred_region
      _
    $region17: #{tpu_custom_call.1} parent=1 // pred_fallthru
      _
    %43 = vsyncpa [#allocation3], 1

</llo_original>
